<compile_context>
chip_gen: v6e
topology: v6e:2x2x1
jax: 0.10.0
libtpu: 0.0.40
codegen_flags: <defaults>
</compile_context>

<pallas_src>
import jax
import jax.numpy as jnp
from jax.experimental import pallas as pl
from jax.experimental.pallas import tpu as pltpu

IN_FEATURES = 9
LANE = 128   # pad classcount up to a multiple of 128 for lane-dense stores


def _round_up(n, m):
    return ((n + m - 1) // m) * m


def mlp_kernel(x_ref, w1_ref, b1_ref, w2_ref, b2_ref,
               w3_ref, b3_ref, w4_ref, b4_ref, o_ref):
    # f32 -> bf16 cast happens in-kernel; bf16 matmul inputs, f32 accumulation,
    # f32 bias add, ReLU in f32, bf16 store.
    xb = x_ref[...].astype(jnp.bfloat16)

    h = jnp.dot(xb, w1_ref[...],
                preferred_element_type=jnp.float32) + b1_ref[...]
    h = jnp.maximum(h, 0.0).astype(jnp.bfloat16)

    h = jnp.dot(h, w2_ref[...],
                preferred_element_type=jnp.float32) + b2_ref[...]
    h = jnp.maximum(h, 0.0).astype(jnp.bfloat16)

    h = jnp.dot(h, w3_ref[...],
                preferred_element_type=jnp.float32) + b3_ref[...]
    h = jnp.maximum(h, 0.0).astype(jnp.bfloat16)

    h = jnp.dot(h, w4_ref[...],
                preferred_element_type=jnp.float32) + b4_ref[...]
    o_ref[...] = h.astype(o_ref.dtype)   # bf16 writeback (dominant HBM stream)


def pack_params(params):
    """One-time packing: bf16 weight casts, lane-pad the final layer.

    Returns (packed_tuple, classcount). Call once; reuse across forward calls.
    """
    (w1, b1), (w2, b2), (w3, b3), (w4, b4) = params
    C = w4.shape[1]
    C_pad = _round_up(C, LANE)
    w4p = jnp.zeros((16, C_pad), jnp.bfloat16).at[:, :C].set(
        w4.astype(jnp.bfloat16))
    b4p = jnp.zeros((1, C_pad), jnp.float32).at[:, :C].set(
        b4.reshape(1, -1).astype(jnp.float32))
    packed = (
        w1.astype(jnp.bfloat16), b1.reshape(1, -1).astype(jnp.float32),
        w2.astype(jnp.bfloat16), b2.reshape(1, -1).astype(jnp.float32),
        w3.astype(jnp.bfloat16), b3.reshape(1, -1).astype(jnp.float32),
        w4p, b4p,
    )
    return packed, C


def simple_mapper_forward(x, packed, classcount, *, block_b=8192):
    """x: (B, 9) float32, packed from pack_params -> (B, classcount) float32."""
    w1, b1, w2, b2, w3, b3, w4p, b4p = packed
    B = x.shape[0]
    C = classcount
    C_pad = w4p.shape[1]

    # Batch tile: multiple of 256 (amortize ~0.35us/step overhead + MXU
    # push/drain), at least 2 grid steps for mid/large batches so both v7x
    # TensorCores get work, capped at block_b to respect v7x's 64 MiB VMEM.
    TB = min(block_b, _round_up(max(pl.cdiv(B, 2), 1), 256))
    B_pad = _round_up(B, TB)
    grid = (B_pad // TB,)

    # Only batch padding (zeros); no feature padding / dtype pass over x.
    xp = x if B_pad == B else jnp.pad(x, ((0, B_pad - B), (0, 0)))

    const = lambda i: (0, 0)  # weights/biases stay resident across batch tiles

    flops = 2 * B_pad * (IN_FEATURES * 64 + 64 * 32 + 32 * 16 + 16 * C_pad)
    weight_bytes = (w1.size + w2.size + w3.size + w4p.size) * 2 \
        + (b1.size + b2.size + b3.size + b4p.size) * 4
    bytes_accessed = B_pad * IN_FEATURES * 4 + B_pad * C_pad * 2 + weight_bytes

    out = pl.pallas_call(
        mlp_kernel,
        out_shape=jax.ShapeDtypeStruct((B_pad, C_pad), jnp.bfloat16),
        grid=grid,
        in_specs=[
            pl.BlockSpec((TB, IN_FEATURES), lambda i: (i, 0)),  # x tiled on B
            pl.BlockSpec((IN_FEATURES, 64), const),             # w1 (resident)
            pl.BlockSpec((1, 64), const),                       # b1
            pl.BlockSpec((64, 32), const),                      # w2
            pl.BlockSpec((1, 32), const),                       # b2
            pl.BlockSpec((32, 16), const),                      # w3
            pl.BlockSpec((1, 16), const),                       # b3
            pl.BlockSpec((16, C_pad), const),                   # w4 (lane-pad)
            pl.BlockSpec((1, C_pad), const),                    # b4
        ],
        out_specs=pl.BlockSpec((TB, C_pad), lambda i: (i, 0)),
        compiler_params=pltpu.CompilerParams(
            dimension_semantics=("parallel",),
            vmem_limit_bytes=48 * 1024 * 1024,
        ),
        cost_estimate=pl.CostEstimate(
            flops=flops, transcendentals=0, bytes_accessed=bytes_accessed),
    )(xp, w1, b1, w2, b2, w3, b3, w4p, b4p)

    # Slice over the bf16 buffer (half the bytes of the old f32 slice pass),
    # then upcast to the module's f32 output dtype.
    return out[:B, :C].astype(jnp.float32)


def init_params(key, classcount):
    """Matches SimpleMapper._init_weights: kaiming_normal_(fan_out, relu) on
    the (out, in) weight -> std = sqrt(2 / out_features); zero biases. Stored
    in transposed (in, out) layout."""
    dims = [(9, 64), (64, 32), (32, 16), (16, classcount)]
    params = []
    for (fan_in, fan_out) in dims:
        key, sub = jax.random.split(key)
        std = (2.0 / fan_out) ** 0.5
        w = jax.random.normal(sub, (fan_in, fan_out), dtype=jnp.float32) * std
        b = jnp.zeros((1, fan_out), dtype=jnp.float32)
        params.append((w, b))
    return params


if __name__ == "__main__":
    key = jax.random.PRNGKey(0)
    k_x, k_p = jax.random.split(key)

    batch = 8
    classcount = 10
    x = jax.random.normal(k_x, (batch, 9), dtype=jnp.float32)
    params = init_params(k_p, classcount)
    packed, C = pack_params(params)

    out = simple_mapper_forward(x, packed, C)
    out = jax.block_until_ready(out)
    assert out.shape == (batch, classcount)

    # Reference mirroring the kernel's numerics: bf16 inputs/weights, f32
    # accumulation + bias, bf16 intermediate casts, bf16 final store.
    ref = x.astype(jnp.bfloat16)
    for i, (w, b) in enumerate(params):
        ref = jnp.dot(ref, w.astype(jnp.bfloat16),
                      preferred_element_type=jnp.float32) + b
        if i < 3:
            ref = jnp.maximum(ref, 0.0).astype(jnp.bfloat16)
    ref = ref.astype(jnp.bfloat16).astype(jnp.float32)
    assert jnp.allclose(out, ref, atol=2e-2, rtol=2e-2), \
        float(jnp.max(jnp.abs(out - ref)))

    print("KERNEL_OK")
</pallas_src>

<mosaic_0001>
module attributes {stable_mosaic.version = 11 : i64} {
  func.func @mlp_kernel(%arg0: i32, %arg1: memref<256x9xf32, #tpu.memory_space<vmem>>, %arg2: memref<9x64xbf16, #tpu.memory_space<vmem>>, %arg3: memref<1x64xf32, #tpu.memory_space<vmem>>, %arg4: memref<64x32xbf16, #tpu.memory_space<vmem>>, %arg5: memref<1x32xf32, #tpu.memory_space<vmem>>, %arg6: memref<32x16xbf16, #tpu.memory_space<vmem>>, %arg7: memref<1x16xf32, #tpu.memory_space<vmem>>, %arg8: memref<16x128xbf16, #tpu.memory_space<vmem>>, %arg9: memref<1x128xf32, #tpu.memory_space<vmem>>, %arg10: memref<256x128xbf16, #tpu.memory_space<vmem>>) attributes {dimension_semantics = [#tpu.dimension_semantics<parallel>], iteration_bounds = array<i64: 1>, scalar_prefetch = 0 : i64, scratch_operands = 0 : i64, tpu.core_type = #tpu.core_type<tc>, window_params = [{transform_indices = @transform_0, window_bounds = array<i64: 256, 9>}, {pipeline_mode = #tpu.pipeline_mode<synchronous>, transform_indices = @transform_1, window_bounds = array<i64: 9, 64>}, {pipeline_mode = #tpu.pipeline_mode<synchronous>, transform_indices = @transform_2, window_bounds = array<i64: 1, 64>}, {pipeline_mode = #tpu.pipeline_mode<synchronous>, transform_indices = @transform_3, window_bounds = array<i64: 64, 32>}, {pipeline_mode = #tpu.pipeline_mode<synchronous>, transform_indices = @transform_4, window_bounds = array<i64: 1, 32>}, {pipeline_mode = #tpu.pipeline_mode<synchronous>, transform_indices = @transform_5, window_bounds = array<i64: 32, 16>}, {pipeline_mode = #tpu.pipeline_mode<synchronous>, transform_indices = @transform_6, window_bounds = array<i64: 1, 16>}, {pipeline_mode = #tpu.pipeline_mode<synchronous>, transform_indices = @transform_7, window_bounds = array<i64: 16, 128>}, {pipeline_mode = #tpu.pipeline_mode<synchronous>, transform_indices = @transform_8, window_bounds = array<i64: 1, 128>}, {transform_indices = @transform_9, window_bounds = array<i64: 256, 128>}]} {
    %c0 = arith.constant 0 : index
    %c0_0 = arith.constant 0 : index
    %0 = vector.load %arg1[%c0, %c0_0] : memref<256x9xf32, #tpu.memory_space<vmem>>, vector<256x9xf32>
    %1 = arith.truncf %0 : vector<256x9xf32> to vector<256x9xbf16>
    %c0_1 = arith.constant 0 : index
    %c0_2 = arith.constant 0 : index
    %2 = vector.load %arg2[%c0_1, %c0_2] : memref<9x64xbf16, #tpu.memory_space<vmem>>, vector<9x64xbf16>
    %cst = arith.constant dense<0.000000e+00> : vector<256x64xf32>
    %3 = tpu.matmul %1, %2, %cst {dimension_numbers = #tpu.dot_dimension_numbers<[1], [0], [0], [1], [0, 0, 1, 1], [], []>} : vector<256x9xbf16>, vector<9x64xbf16>, vector<256x64xf32> -> vector<256x64xf32>
    %c0_3 = arith.constant 0 : index
    %c0_4 = arith.constant 0 : index
    %4 = vector.load %arg3[%c0_3, %c0_4] : memref<1x64xf32, #tpu.memory_space<vmem>>, vector<1x64xf32>
    %5 = vector.broadcast %4 : vector<1x64xf32> to vector<256x64xf32>
    %6 = arith.addf %3, %5 : vector<256x64xf32>
    %cst_5 = arith.constant 0.000000e+00 : f32
    %7 = vector.broadcast %cst_5 : f32 to vector<256x64xf32>
    %8 = arith.maximumf %6, %7 : vector<256x64xf32>
    %9 = arith.truncf %8 : vector<256x64xf32> to vector<256x64xbf16>
    %c0_6 = arith.constant 0 : index
    %c0_7 = arith.constant 0 : index
    %10 = vector.load %arg4[%c0_6, %c0_7] : memref<64x32xbf16, #tpu.memory_space<vmem>>, vector<64x32xbf16>
    %cst_8 = arith.constant dense<0.000000e+00> : vector<256x32xf32>
    %11 = tpu.matmul %9, %10, %cst_8 {dimension_numbers = #tpu.dot_dimension_numbers<[1], [0], [0], [1], [0, 0, 1, 1], [], []>} : vector<256x64xbf16>, vector<64x32xbf16>, vector<256x32xf32> -> vector<256x32xf32>
    %c0_9 = arith.constant 0 : index
    %c0_10 = arith.constant 0 : index
    %12 = vector.load %arg5[%c0_9, %c0_10] : memref<1x32xf32, #tpu.memory_space<vmem>>, vector<1x32xf32>
    %13 = vector.broadcast %12 : vector<1x32xf32> to vector<256x32xf32>
    %14 = arith.addf %11, %13 : vector<256x32xf32>
    %cst_11 = arith.constant 0.000000e+00 : f32
    %15 = vector.broadcast %cst_11 : f32 to vector<256x32xf32>
    %16 = arith.maximumf %14, %15 : vector<256x32xf32>
    %17 = arith.truncf %16 : vector<256x32xf32> to vector<256x32xbf16>
    %c0_12 = arith.constant 0 : index
    %c0_13 = arith.constant 0 : index
    %18 = vector.load %arg6[%c0_12, %c0_13] : memref<32x16xbf16, #tpu.memory_space<vmem>>, vector<32x16xbf16>
    %cst_14 = arith.constant dense<0.000000e+00> : vector<256x16xf32>
    %19 = tpu.matmul %17, %18, %cst_14 {dimension_numbers = #tpu.dot_dimension_numbers<[1], [0], [0], [1], [0, 0, 1, 1], [], []>} : vector<256x32xbf16>, vector<32x16xbf16>, vector<256x16xf32> -> vector<256x16xf32>
    %c0_15 = arith.constant 0 : index
    %c0_16 = arith.constant 0 : index
    %20 = vector.load %arg7[%c0_15, %c0_16] : memref<1x16xf32, #tpu.memory_space<vmem>>, vector<1x16xf32>
    %21 = vector.broadcast %20 : vector<1x16xf32> to vector<256x16xf32>
    %22 = arith.addf %19, %21 : vector<256x16xf32>
    %cst_17 = arith.constant 0.000000e+00 : f32
    %23 = vector.broadcast %cst_17 : f32 to vector<256x16xf32>
    %24 = arith.maximumf %22, %23 : vector<256x16xf32>
    %25 = arith.truncf %24 : vector<256x16xf32> to vector<256x16xbf16>
    %c0_18 = arith.constant 0 : index
    %c0_19 = arith.constant 0 : index
    %26 = vector.load %arg8[%c0_18, %c0_19] : memref<16x128xbf16, #tpu.memory_space<vmem>>, vector<16x128xbf16>
    %cst_20 = arith.constant dense<0.000000e+00> : vector<256x128xf32>
    %27 = tpu.matmul %25, %26, %cst_20 {dimension_numbers = #tpu.dot_dimension_numbers<[1], [0], [0], [1], [0, 0, 1, 1], [], []>} : vector<256x16xbf16>, vector<16x128xbf16>, vector<256x128xf32> -> vector<256x128xf32>
    %c0_21 = arith.constant 0 : index
    %c0_22 = arith.constant 0 : index
    %28 = vector.load %arg9[%c0_21, %c0_22] : memref<1x128xf32, #tpu.memory_space<vmem>>, vector<1x128xf32>
    %29 = vector.broadcast %28 : vector<1x128xf32> to vector<256x128xf32>
    %30 = arith.addf %27, %29 : vector<256x128xf32>
    %31 = arith.truncf %30 : vector<256x128xf32> to vector<256x128xbf16>
    %c0_23 = arith.constant 0 : index
    %c0_24 = arith.constant 0 : index
    %32 = vector.load %arg10[%c0_23, %c0_24] : memref<256x128xbf16, #tpu.memory_space<vmem>>, vector<256x128xbf16>
    tpu.vector_store %arg10[%c0_23, %c0_24], %31 {strides = array<i32>} : memref<256x128xbf16, #tpu.memory_space<vmem>>, vector<256x128xbf16>,
    return
  }
  func.func @transform_0(%arg0: i32) -> (i32, i32) {
    %c0_i32 = arith.constant 0 : i32
    %c0_i32_0 = arith.constant 0 : i32
    return %arg0, %c0_i32 : i32, i32
  }
  func.func @transform_1(%arg0: i32) -> (i32, i32) {
    %c0_i32 = arith.constant 0 : i32
    %c0_i32_0 = arith.constant 0 : i32
    %c0_i32_1 = arith.constant 0 : i32
    return %c0_i32, %c0_i32_0 : i32, i32
  }
  func.func @transform_2(%arg0: i32) -> (i32, i32) {
    %c0_i32 = arith.constant 0 : i32
    %c0_i32_0 = arith.constant 0 : i32
    %c0_i32_1 = arith.constant 0 : i32
    return %c0_i32, %c0_i32_0 : i32, i32
  }
  func.func @transform_3(%arg0: i32) -> (i32, i32) {
    %c0_i32 = arith.constant 0 : i32
    %c0_i32_0 = arith.constant 0 : i32
    %c0_i32_1 = arith.constant 0 : i32
    return %c0_i32, %c0_i32_0 : i32, i32
  }
  func.func @transform_4(%arg0: i32) -> (i32, i32) {
    %c0_i32 = arith.constant 0 : i32
    %c0_i32_0 = arith.constant 0 : i32
    %c0_i32_1 = arith.constant 0 : i32
    return %c0_i32, %c0_i32_0 : i32, i32
  }
  func.func @transform_5(%arg0: i32) -> (i32, i32) {
    %c0_i32 = arith.constant 0 : i32
    %c0_i32_0 = arith.constant 0 : i32
    %c0_i32_1 = arith.constant 0 : i32
    return %c0_i32, %c0_i32_0 : i32, i32
  }
  func.func @transform_6(%arg0: i32) -> (i32, i32) {
    %c0_i32 = arith.constant 0 : i32
    %c0_i32_0 = arith.constant 0 : i32
    %c0_i32_1 = arith.constant 0 : i32
    return %c0_i32, %c0_i32_0 : i32, i32
  }
  func.func @transform_7(%arg0: i32) -> (i32, i32) {
    %c0_i32 = arith.constant 0 : i32
    %c0_i32_0 = arith.constant 0 : i32
    %c0_i32_1 = arith.constant 0 : i32
    return %c0_i32, %c0_i32_0 : i32, i32
  }
  func.func @transform_8(%arg0: i32) -> (i32, i32) {
    %c0_i32 = arith.constant 0 : i32
    %c0_i32_0 = arith.constant 0 : i32
    %c0_i32_1 = arith.constant 0 : i32
    return %c0_i32, %c0_i32_0 : i32, i32
  }
  func.func @transform_9(%arg0: i32) -> (i32, i32) {
    %c0_i32 = arith.constant 0 : i32
    %c0_i32_0 = arith.constant 0 : i32
    return %arg0, %c0_i32 : i32, i32
  }
}

</mosaic_0001>

<llo_original>
// kernel: tpu_custom_call.1
$region0: #{tpu_custom_call.1}
  #allocation0 [shape = 'u32[]', space=smem, size = 0x4, offset = 0x4, fixed_abs, tag = 'smem constant byte address 0x4 - core index']
  #allocation1 [shape = 'u32[144,128]{1,0:T(1,128)}', space=vmem, size = 0x12000, scoped, tag = 'internal scratch']
  %s0 = inlined_call_operand.vmem [shape: f32[256,9], index: 0, kind: input, shape index: {}]
  %s1 = inlined_call_operand.vmem [shape: bf16[9,64], index: 1, kind: input, shape index: {}]
  %s2 = inlined_call_operand.vmem [shape: f32[1,64], index: 2, kind: input, shape index: {}]
  %s3 = inlined_call_operand.vmem [shape: bf16[64,32], index: 3, kind: input, shape index: {}]
  %s4 = inlined_call_operand.vmem [shape: f32[1,32], index: 4, kind: input, shape index: {}]
  %s5 = inlined_call_operand.vmem [shape: bf16[32,16], index: 5, kind: input, shape index: {}]
  %s6 = inlined_call_operand.vmem [shape: f32[1,16], index: 6, kind: input, shape index: {}]
  %s7 = inlined_call_operand.vmem [shape: bf16[16,128], index: 7, kind: input, shape index: {}]
  %s8 = inlined_call_operand.vmem [shape: f32[1,128], index: 8, kind: input, shape index: {}]
  %s9 = inlined_call_operand.hbm [shape: bf16[256,128], index: 9, kind: output, shape index: {}]
  %s10 = sld [smem:[#allocation0]]
  $region46: #{tpu_custom_call.1} parent=0
    _
  %s12 = ssub.s32 1, %s10
  %s13 = scalar_select 0, %s12, %s10
  $region1: #{tpu_custom_call.1} parent=0
    #allocation2 [shape = 'u8[65536]{0}', space=vmem, size = 0x10000, scoped, tag = 'output window, operand 0, single buffered']
    #allocation3 [shape = 's32[1]{0}', space=sflag, size = 0x4, scoped, tag = 'scoped memory for tpu_custom_call.1']
    %14 = vsyncpa [#allocation3], 0
    // Predicated region
    $region2: #{tpu_custom_call.1} parent=1 // pred_check
      _
    $region3: #{tpu_custom_call.1} parent=1 // pred_check_branch
      %16 = sbr.rel (0) target = $region5
    $region4: #{tpu_custom_call.1} parent=1 // pred_region
      _
    $region5: #{tpu_custom_call.1} parent=1 // pred_fallthru
      _
    // Predicated region
    $region6: #{tpu_custom_call.1} parent=1 // pred_check
      _
    $region7: #{tpu_custom_call.1} parent=1 // pred_check_branch
      %18 = sbr.rel (0) target = $region9
    $region8: #{tpu_custom_call.1} parent=1 // pred_region
      _
    $region9: #{tpu_custom_call.1} parent=1 // pred_fallthru
      _
    // Predicated region
    $region10: #{tpu_custom_call.1} parent=1 // pred_check
      _
    $region11: #{tpu_custom_call.1} parent=1 // pred_check_branch
      %20 = sbr.rel (0) target = $region13
    $region12: #{tpu_custom_call.1} parent=1 // pred_region
      _
    $region13: #{tpu_custom_call.1} parent=1 // pred_fallthru
      _
    // Predicated region
    $region14: #{tpu_custom_call.1} parent=1 // pred_check
      _
    $region15: #{tpu_custom_call.1} parent=1 // pred_check_branch
      %22 = sbr.rel (0) target = $region17
    $region16: #{tpu_custom_call.1} parent=1 // pred_region
      _
    $region17: #{tpu_custom_call.1} parent=1 // pred_fallthru
      _
    // Predicated region
    $region18: #{tpu_custom_call.1} parent=1 // pred_check
      _
    $region19: #{tpu_custom_call.1} parent=1 // pred_check_branch
      %24 = sbr.rel (0) target = $region21
    $region20: #{tpu_custom_call.1} parent=1 // pred_region
      _
    $region21: #{tpu_custom_call.1} parent=1 // pred_fallthru
      _
    // Predicated region
    $region22: #{tpu_custom_call.1} parent=1 // pred_check
      _
    $region23: #{tpu_custom_call.1} parent=1 // pred_check_branch
      %26 = sbr.rel (0) target = $region25
    $region24: #{tpu_custom_call.1} parent=1 // pred_region
      _
    $region25: #{tpu_custom_call.1} parent=1 // pred_fallthru
      _
    // Predicated region
    $region26: #{tpu_custom_call.1} parent=1 // pred_check
      _
    $region27: #{tpu_custom_call.1} parent=1 // pred_check_branch
      %28 = sbr.rel (0) target = $region29
    $region28: #{tpu_custom_call.1} parent=1 // pred_region
      _
    $region29: #{tpu_custom_call.1} parent=1 // pred_fallthru
      _
    // Predicated region
    $region30: #{tpu_custom_call.1} parent=1 // pred_check
      _
    $region31: #{tpu_custom_call.1} parent=1 // pred_check_branch
      %30 = sbr.rel (0) target = $region33
    $region32: #{tpu_custom_call.1} parent=1 // pred_region
      _
    $region33: #{tpu_custom_call.1} parent=1 // pred_fallthru
      _
    // Predicated region
    $region34: #{tpu_custom_call.1} parent=1 // pred_check
      _
    $region35: #{tpu_custom_call.1} parent=1 // pred_check_branch
      %32 = sbr.rel (0) target = $region37
    $region36: #{tpu_custom_call.1} parent=1 // pred_region
      _
    $region37: #{tpu_custom_call.1} parent=1 // pred_fallthru
      _
    %v34 = vld [vmem:[%s0] sm:$0xff]
    %v35 = vld [vmem:[%s0 + $0x8] sm:$0xff]
    %v36 = vld [vmem:[%s0 + $0x10] sm:$0xff]
    %v37 = vld [vmem:[%s0 + $0x18] sm:$0xff]
    %v38 = vld [vmem:[%s0 + $0x20] sm:$0xff]
    %v39 = vld [vmem:[%s0 + $0x28] sm:$0xff]
    %v40 = vld [vmem:[%s0 + $0x30] sm:$0xff]
    %v41 = vld [vmem:[%s0 + $0x38] sm:$0xff]
    %v42 = vld [vmem:[%s0 + $0x40] sm:$0xff]
    %v43 = vld [vmem:[%s0 + $0x48] sm:$0xff]
    %v44 = vld [vmem:[%s0 + $0x50] sm:$0xff]
    %v45 = vld [vmem:[%s0 + $0x58] sm:$0xff]
    %v46 = vld [vmem:[%s0 + $0x60] sm:$0xff]
    %v47 = vld [vmem:[%s0 + $0x68] sm:$0xff]
    %v48 = vld [vmem:[%s0 + $0x70] sm:$0xff]
    %v49 = vld [vmem:[%s0 + $0x78] sm:$0xff]
    %v50 = vld [vmem:[%s0 + $0x80] sm:$0xff]
    %v51 = vld [vmem:[%s0 + $0x88] sm:$0xff]
    %v52 = vld [vmem:[%s0 + $0x90] sm:$0xff]
    %v53 = vld [vmem:[%s0 + $0x98] sm:$0xff]
    %v54 = vld [vmem:[%s0 + $0xa0] sm:$0xff]
    %v55 = vld [vmem:[%s0 + $0xa8] sm:$0xff]
    %v56 = vld [vmem:[%s0 + $0xb0] sm:$0xff]
    %v57 = vld [vmem:[%s0 + $0xb8] sm:$0xff]
    %v58 = vld [vmem:[%s0 + $0xc0] sm:$0xff]
    %v59 = vld [vmem:[%s0 + $0xc8] sm:$0xff]
    %v60 = vld [vmem:[%s0 + $0xd0] sm:$0xff]
    %v61 = vld [vmem:[%s0 + $0xd8] sm:$0xff]
    %v62 = vld [vmem:[%s0 + $0xe0] sm:$0xff]
    %v63 = vld [vmem:[%s0 + $0xe8] sm:$0xff]
    %v64 = vld [vmem:[%s0 + $0xf0] sm:$0xff]
    %v65 = vld [vmem:[%s0 + $0xf8] sm:$0xff]
    %v66 = vpack.c.bf16 %v35, %v34
    %v67 = vpack.c.bf16 %v37, %v36
    %v68 = vpack.c.bf16 %v39, %v38
    %v69 = vpack.c.bf16 %v41, %v40
    %v70 = vpack.c.bf16 %v43, %v42
    %v71 = vpack.c.bf16 %v45, %v44
    %v72 = vpack.c.bf16 %v47, %v46
    %v73 = vpack.c.bf16 %v49, %v48
    %v74 = vpack.c.bf16 %v51, %v50
    %v75 = vpack.c.bf16 %v53, %v52
    %v76 = vpack.c.bf16 %v55, %v54
    %v77 = vpack.c.bf16 %v57, %v56
    %v78 = vpack.c.bf16 %v59, %v58
    %v79 = vpack.c.bf16 %v61, %v60
    %v80 = vpack.c.bf16 %v63, %v62
    %v81 = vpack.c.bf16 %v65, %v64
    %v82 = vld [vmem:[%s1] sm:$0xf]
    %v83 = vld [vmem:[%s1 + $0x4] sm:$0x1]
    %v84 = vld [vmem:[%s2] sm:$0x1]
    %v86 = vlaneseq
    %v87 = vshrl.u32 %v86, 7
    %v88 = vsub.s32 0, %v87
    %v89 = vrot.slane %v84, %v88
    %v93 = vunpack.c.l.b16 %v82
    %v94 = vunpack.c.l.b16 %v83
    %v95 = vpack.c.b16 %v94, %v93
    %vm96 = vcmask 72704
    %v98 = vsel %vm96, %v66, 0
    %v101 = vsel %vm96, %v67, 0
    %v104 = vsel %vm96, %v68, 0
    %v107 = vsel %vm96, %v69, 0
    %v110 = vsel %vm96, %v70, 0
    %v113 = vsel %vm96, %v71, 0
    %v116 = vsel %vm96, %v72, 0
    %v119 = vsel %vm96, %v73, 0
    %v122 = vsel %vm96, %v74, 0
    %v125 = vsel %vm96, %v75, 0
    %v128 = vsel %vm96, %v76, 0
    %v131 = vsel %vm96, %v77, 0
    %v134 = vsel %vm96, %v78, 0
    %v137 = vsel %vm96, %v79, 0
    %v140 = vsel %vm96, %v80, 0
    %v143 = vsel %vm96, %v81, 0
    %vm145 = vcmask 1043456
    %vm146 = vcmask 1044480
    %v147 = vsel %vm145, 4294967295, 65535
    %v148 = vsel %vm146, %v147, 0
    %v150 = vand.u32 %v95, %v148
    %152 = vmatprep.subr.bf16.mxu0 0
    %153 = vmatpush1.bf16.msra.mxu0 0
    %154 = vmatprep.subr.bf16.mxu0 0
    %155 = vmatpush1.bf16.msra.mxu0 0
    %156 = vmatprep.subr.bf16.mxu0 0
    %157 = vmatpush1.bf16.msra.mxu0 0
    %158 = vmatprep.subr.bf16.mxu0 0
    %159 = vmatpush1.bf16.msra.mxu0 0
    %160 = vmatprep.subr.bf16.mxu0 0
    %161 = vmatpush1.bf16.msra.mxu0 0
    %162 = vmatprep.subr.bf16.mxu0 0
    %163 = vmatpush1.bf16.msra.mxu0 0
    %164 = vmatprep.subr.bf16.mxu0 0
    %165 = vmatpush1.bf16.msra.mxu0 0
    %166 = vmatprep.subr.bf16.mxu0 0
    %167 = vmatpush1.bf16.msra.mxu0 %v150
    %168 = vmatprep.subr.bf16.mxu0 0
    %169 = vmatpush2.bf16.msra.mxu0 0
    %170 = vmatprep.subr.bf16.mxu0 0
    %171 = vmatpush2.bf16.msra.mxu0 0
    %172 = vmatprep.subr.bf16.mxu0 0
    %173 = vmatpush2.bf16.msra.mxu0 0
    %174 = vmatprep.subr.bf16.mxu0 0
    %175 = vmatpush2.bf16.msra.mxu0 0
    %176 = vmatprep.subr.bf16.mxu0 0
    %177 = vmatpush2.bf16.msra.mxu0 0
    %178 = vmatprep.subr.bf16.mxu0 0
    %179 = vmatpush2.bf16.msra.mxu0 0
    %180 = vmatprep.subr.bf16.mxu0 0
    %181 = vmatpush2.bf16.msra.mxu0 0
    %182 = vmatprep.subr.bf16.mxu0 0
    %183 = vmatpush2.bf16.msra.mxu0 0
    %184 = vmatprep.mubr.bf16.mxu0 0
    %185 = vmatmul.mubr.bf16.gmra.mxu0 %v98
    %v186 = vpop.f32.mrf.mxu0
    %v187 = vadd.f32 %v89, %v186
    %v188 = vpop.f32.mrf.mxu0
    %v189 = vpop.f32.mrf.mxu0
    %v190 = vadd.f32 %v89, %v189
    %v191 = vpop.f32.mrf.mxu0
    %192 = vmatprep.mubr.bf16.mxu0 0
    %193 = vmatmul.mubr.bf16.gmra.mxu0 %v101
    %v194 = vpop.f32.mrf.mxu0
    %v195 = vadd.f32 %v89, %v194
    %v196 = vpop.f32.mrf.mxu0
    %v197 = vpop.f32.mrf.mxu0
    %v198 = vadd.f32 %v89, %v197
    %v199 = vpop.f32.mrf.mxu0
    %200 = vmatprep.mubr.bf16.mxu0 0
    %201 = vmatmul.mubr.bf16.gmra.mxu0 %v104
    %v202 = vpop.f32.mrf.mxu0
    %v203 = vadd.f32 %v89, %v202
    %v204 = vpop.f32.mrf.mxu0
    %v205 = vpop.f32.mrf.mxu0
    %v206 = vadd.f32 %v89, %v205
    %v207 = vpop.f32.mrf.mxu0
    %208 = vmatprep.mubr.bf16.mxu0 0
    %209 = vmatmul.mubr.bf16.gmra.mxu0 %v107
    %v210 = vpop.f32.mrf.mxu0
    %v211 = vadd.f32 %v89, %v210
    %v212 = vpop.f32.mrf.mxu0
    %v213 = vpop.f32.mrf.mxu0
    %v214 = vadd.f32 %v89, %v213
    %v215 = vpop.f32.mrf.mxu0
    %216 = vmatprep.mubr.bf16.mxu0 0
    %217 = vmatmul.mubr.bf16.gmra.mxu0 %v110
    %v218 = vpop.f32.mrf.mxu0
    %v219 = vadd.f32 %v89, %v218
    %v220 = vpop.f32.mrf.mxu0
    %v221 = vpop.f32.mrf.mxu0
    %v222 = vadd.f32 %v89, %v221
    %v223 = vpop.f32.mrf.mxu0
    %224 = vmatprep.mubr.bf16.mxu0 0
    %225 = vmatmul.mubr.bf16.gmra.mxu0 %v113
    %v226 = vpop.f32.mrf.mxu0
    %v227 = vadd.f32 %v89, %v226
    %v228 = vpop.f32.mrf.mxu0
    %v229 = vpop.f32.mrf.mxu0
    %v230 = vadd.f32 %v89, %v229
    %v231 = vpop.f32.mrf.mxu0
    %232 = vmatprep.mubr.bf16.mxu0 0
    %233 = vmatmul.mubr.bf16.gmra.mxu0 %v116
    %v234 = vpop.f32.mrf.mxu0
    %v235 = vadd.f32 %v89, %v234
    %v236 = vpop.f32.mrf.mxu0
    %v237 = vpop.f32.mrf.mxu0
    %v238 = vadd.f32 %v89, %v237
    %v239 = vpop.f32.mrf.mxu0
    %240 = vmatprep.mubr.bf16.mxu0 0
    %241 = vmatmul.mubr.bf16.gmra.mxu0 %v119
    %v242 = vpop.f32.mrf.mxu0
    %v243 = vadd.f32 %v89, %v242
    %v244 = vpop.f32.mrf.mxu0
    %v245 = vpop.f32.mrf.mxu0
    %v246 = vadd.f32 %v89, %v245
    %v247 = vpop.f32.mrf.mxu0
    %248 = vmatprep.mubr.bf16.mxu0 0
    %249 = vmatmul.mubr.bf16.gmra.mxu0 %v122
    %v250 = vpop.f32.mrf.mxu0
    %v251 = vadd.f32 %v89, %v250
    %v252 = vpop.f32.mrf.mxu0
    %v253 = vpop.f32.mrf.mxu0
    %v254 = vadd.f32 %v89, %v253
    %v255 = vpop.f32.mrf.mxu0
    %256 = vmatprep.mubr.bf16.mxu0 0
    %257 = vmatmul.mubr.bf16.gmra.mxu0 %v125
    %v258 = vpop.f32.mrf.mxu0
    %v259 = vadd.f32 %v89, %v258
    %v260 = vpop.f32.mrf.mxu0
    %v261 = vpop.f32.mrf.mxu0
    %v262 = vadd.f32 %v89, %v261
    %v263 = vpop.f32.mrf.mxu0
    %264 = vmatprep.mubr.bf16.mxu0 0
    %265 = vmatmul.mubr.bf16.gmra.mxu0 %v128
    %v266 = vpop.f32.mrf.mxu0
    %v267 = vadd.f32 %v89, %v266
    %v268 = vpop.f32.mrf.mxu0
    %v269 = vpop.f32.mrf.mxu0
    %v270 = vadd.f32 %v89, %v269
    %v271 = vpop.f32.mrf.mxu0
    %272 = vmatprep.mubr.bf16.mxu0 0
    %273 = vmatmul.mubr.bf16.gmra.mxu0 %v131
    %v274 = vpop.f32.mrf.mxu0
    %v275 = vadd.f32 %v89, %v274
    %v276 = vpop.f32.mrf.mxu0
    %v277 = vpop.f32.mrf.mxu0
    %v278 = vadd.f32 %v89, %v277
    %v279 = vpop.f32.mrf.mxu0
    %280 = vmatprep.mubr.bf16.mxu0 0
    %281 = vmatmul.mubr.bf16.gmra.mxu0 %v134
    %v282 = vpop.f32.mrf.mxu0
    %v283 = vadd.f32 %v89, %v282
    %v284 = vpop.f32.mrf.mxu0
    %v285 = vpop.f32.mrf.mxu0
    %v286 = vadd.f32 %v89, %v285
    %v287 = vpop.f32.mrf.mxu0
    %288 = vmatprep.mubr.bf16.mxu0 0
    %289 = vmatmul.mubr.bf16.gmra.mxu0 %v137
    %v290 = vpop.f32.mrf.mxu0
    %v291 = vadd.f32 %v89, %v290
    %v292 = vpop.f32.mrf.mxu0
    %v293 = vpop.f32.mrf.mxu0
    %v294 = vadd.f32 %v89, %v293
    %v295 = vpop.f32.mrf.mxu0
    %296 = vmatprep.mubr.bf16.mxu0 0
    %297 = vmatmul.mubr.bf16.gmra.mxu0 %v140
    %v298 = vpop.f32.mrf.mxu0
    %v299 = vadd.f32 %v89, %v298
    %v300 = vpop.f32.mrf.mxu0
    %v301 = vpop.f32.mrf.mxu0
    %v302 = vadd.f32 %v89, %v301
    %v303 = vpop.f32.mrf.mxu0
    %304 = vmatprep.mubr.bf16.mxu0 0
    %305 = vmatmul.mubr.bf16.gmra.mxu0 %v143
    %v306 = vpop.f32.mrf.mxu0
    %v307 = vadd.f32 %v89, %v306
    %v308 = vpop.f32.mrf.mxu0
    %v309 = vpop.f32.mrf.mxu0
    %v310 = vadd.f32 %v89, %v309
    %v311 = vpop.f32.mrf.mxu0
    %312 = vdwg.mxu0
    %v313 = vmax.f32 %v187, 0.0
    %v314 = vmax.f32 %v190, 0.0
    %v315 = vmax.f32 %v195, 0.0
    %v316 = vmax.f32 %v198, 0.0
    %v317 = vmax.f32 %v203, 0.0
    %v318 = vmax.f32 %v206, 0.0
    %v319 = vmax.f32 %v211, 0.0
    %v320 = vmax.f32 %v214, 0.0
    %v321 = vmax.f32 %v219, 0.0
    %v322 = vmax.f32 %v222, 0.0
    %v323 = vmax.f32 %v227, 0.0
    %v324 = vmax.f32 %v230, 0.0
    %v325 = vmax.f32 %v235, 0.0
    %v326 = vmax.f32 %v238, 0.0
    %v327 = vmax.f32 %v243, 0.0
    %v328 = vmax.f32 %v246, 0.0
    %v329 = vmax.f32 %v251, 0.0
    %v330 = vmax.f32 %v254, 0.0
    %v331 = vmax.f32 %v259, 0.0
    %v332 = vmax.f32 %v262, 0.0
    %v333 = vmax.f32 %v267, 0.0
    %v334 = vmax.f32 %v270, 0.0
    %v335 = vmax.f32 %v275, 0.0
    %v336 = vmax.f32 %v278, 0.0
    %v337 = vmax.f32 %v283, 0.0
    %v338 = vmax.f32 %v286, 0.0
    %v339 = vmax.f32 %v291, 0.0
    %v340 = vmax.f32 %v294, 0.0
    %v341 = vmax.f32 %v299, 0.0
    %v342 = vmax.f32 %v302, 0.0
    %v343 = vmax.f32 %v307, 0.0
    %v344 = vmax.f32 %v310, 0.0
    %v345 = vpack.c.bf16 %v314, %v313
    %v346 = vpack.c.bf16 %v316, %v315
    %v347 = vpack.c.bf16 %v318, %v317
    %v348 = vpack.c.bf16 %v320, %v319
    %v349 = vpack.c.bf16 %v322, %v321
    %v350 = vpack.c.bf16 %v324, %v323
    %v351 = vpack.c.bf16 %v326, %v325
    %v352 = vpack.c.bf16 %v328, %v327
    %v353 = vpack.c.bf16 %v330, %v329
    %v354 = vpack.c.bf16 %v332, %v331
    %v355 = vpack.c.bf16 %v334, %v333
    %v356 = vpack.c.bf16 %v336, %v335
    %v357 = vpack.c.bf16 %v338, %v337
    %v358 = vpack.c.bf16 %v340, %v339
    %v359 = vpack.c.bf16 %v342, %v341
    %v360 = vpack.c.bf16 %v344, %v343
    %v361 = vld [vmem:[%s3] sm:$0xf]
    %v362 = vld [vmem:[%s3 + $0x4] sm:$0xf]
    %v363 = vld [vmem:[%s3 + $0x8] sm:$0xf]
    %v364 = vld [vmem:[%s3 + $0xc] sm:$0xf]
    %v365 = vld [vmem:[%s3 + $0x10] sm:$0xf]
    %v366 = vld [vmem:[%s3 + $0x14] sm:$0xf]
    %v367 = vld [vmem:[%s3 + $0x18] sm:$0xf]
    %v368 = vld [vmem:[%s3 + $0x1c] sm:$0xf]
    %v369 = vld [vmem:[%s4] sm:$0x1]
    %v371 = vlaneseq
    %v372 = vshrl.u32 %v371, 7
    %v373 = vsub.s32 0, %v372
    %v374 = vrot.slane %v369, %v373
    %v384 = vunpack.c.l.b16 %v361
    %v385 = vunpack.c.l.b16 %v362
    %v386 = vunpack.c.l.b16 %v363
    %v387 = vunpack.c.l.b16 %v364
    %v388 = vunpack.c.l.b16 %v365
    %v389 = vunpack.c.l.b16 %v366
    %v390 = vunpack.c.l.b16 %v367
    %v391 = vunpack.c.l.b16 %v368
    %v392 = vpack.c.b16 %v385, %v384
    %v393 = vpack.c.b16 %v387, %v386
    %v394 = vpack.c.b16 %v389, %v388
    %v395 = vpack.c.b16 %v391, %v390
    %vm400 = vcmask 523264
    %v402 = vsel %vm400, %v345, 0
    %v405 = vsel %vm400, %v346, 0
    %v408 = vsel %vm400, %v347, 0
    %v411 = vsel %vm400, %v348, 0
    %v414 = vsel %vm400, %v349, 0
    %v417 = vsel %vm400, %v350, 0
    %v420 = vsel %vm400, %v351, 0
    %v423 = vsel %vm400, %v352, 0
    %v426 = vsel %vm400, %v353, 0
    %v429 = vsel %vm400, %v354, 0
    %v432 = vsel %vm400, %v355, 0
    %v435 = vsel %vm400, %v356, 0
    %v438 = vsel %vm400, %v357, 0
    %v441 = vsel %vm400, %v358, 0
    %v444 = vsel %vm400, %v359, 0
    %v447 = vsel %vm400, %v360, 0
    %449 = vmatprep.subr.bf16.mxu0 0
    %450 = vmatpush1.bf16.msra.mxu0 0
    %451 = vmatprep.subr.bf16.mxu0 0
    %452 = vmatpush1.bf16.msra.mxu0 0
    %453 = vmatprep.subr.bf16.mxu0 0
    %454 = vmatpush1.bf16.msra.mxu0 0
    %455 = vmatprep.subr.bf16.mxu0 0
    %456 = vmatpush1.bf16.msra.mxu0 0
    %457 = vmatprep.subr.bf16.mxu0 0
    %458 = vmatpush1.bf16.msra.mxu0 %v395
    %459 = vmatprep.subr.bf16.mxu0 0
    %460 = vmatpush1.bf16.msra.mxu0 %v394
    %461 = vmatprep.subr.bf16.mxu0 0
    %462 = vmatpush1.bf16.msra.mxu0 %v393
    %463 = vmatprep.subr.bf16.mxu0 0
    %464 = vmatpush1.bf16.msra.mxu0 %v392
    %465 = vmatprep.subr.bf16.mxu0 0
    %466 = vmatpush2.bf16.msra.mxu0 0
    %467 = vmatprep.subr.bf16.mxu0 0
    %468 = vmatpush2.bf16.msra.mxu0 0
    %469 = vmatprep.subr.bf16.mxu0 0
    %470 = vmatpush2.bf16.msra.mxu0 0
    %471 = vmatprep.subr.bf16.mxu0 0
    %472 = vmatpush2.bf16.msra.mxu0 0
    %473 = vmatprep.subr.bf16.mxu0 0
    %474 = vmatpush2.bf16.msra.mxu0 0
    %475 = vmatprep.subr.bf16.mxu0 0
    %476 = vmatpush2.bf16.msra.mxu0 0
    %477 = vmatprep.subr.bf16.mxu0 0
    %478 = vmatpush2.bf16.msra.mxu0 0
    %479 = vmatprep.subr.bf16.mxu0 0
    %480 = vmatpush2.bf16.msra.mxu0 0
    %481 = vmatprep.mubr.bf16.mxu0 0
    %482 = vmatmul.mubr.bf16.gmra.mxu0 %v402
    %v483 = vpop.f32.mrf.mxu0
    %v484 = vadd.f32 %v374, %v483
    %v485 = vpop.f32.mrf.mxu0
    %v486 = vpop.f32.mrf.mxu0
    %v487 = vadd.f32 %v374, %v486
    %v488 = vpop.f32.mrf.mxu0
    %489 = vmatprep.mubr.bf16.mxu0 0
    %490 = vmatmul.mubr.bf16.gmra.mxu0 %v405
    %v491 = vpop.f32.mrf.mxu0
    %v492 = vadd.f32 %v374, %v491
    %v493 = vpop.f32.mrf.mxu0
    %v494 = vpop.f32.mrf.mxu0
    %v495 = vadd.f32 %v374, %v494
    %v496 = vpop.f32.mrf.mxu0
    %497 = vmatprep.mubr.bf16.mxu0 0
    %498 = vmatmul.mubr.bf16.gmra.mxu0 %v408
    %v499 = vpop.f32.mrf.mxu0
    %v500 = vadd.f32 %v374, %v499
    %v501 = vpop.f32.mrf.mxu0
    %v502 = vpop.f32.mrf.mxu0
    %v503 = vadd.f32 %v374, %v502
    %v504 = vpop.f32.mrf.mxu0
    %505 = vmatprep.mubr.bf16.mxu0 0
    %506 = vmatmul.mubr.bf16.gmra.mxu0 %v411
    %v507 = vpop.f32.mrf.mxu0
    %v508 = vadd.f32 %v374, %v507
    %v509 = vpop.f32.mrf.mxu0
    %v510 = vpop.f32.mrf.mxu0
    %v511 = vadd.f32 %v374, %v510
    %v512 = vpop.f32.mrf.mxu0
    %513 = vmatprep.mubr.bf16.mxu0 0
    %514 = vmatmul.mubr.bf16.gmra.mxu0 %v414
    %v515 = vpop.f32.mrf.mxu0
    %v516 = vadd.f32 %v374, %v515
    %v517 = vpop.f32.mrf.mxu0
    %v518 = vpop.f32.mrf.mxu0
    %v519 = vadd.f32 %v374, %v518
    %v520 = vpop.f32.mrf.mxu0
    %521 = vmatprep.mubr.bf16.mxu0 0
    %522 = vmatmul.mubr.bf16.gmra.mxu0 %v417
    %v523 = vpop.f32.mrf.mxu0
    %v524 = vadd.f32 %v374, %v523
    %v525 = vpop.f32.mrf.mxu0
    %v526 = vpop.f32.mrf.mxu0
    %v527 = vadd.f32 %v374, %v526
    %v528 = vpop.f32.mrf.mxu0
    %529 = vmatprep.mubr.bf16.mxu0 0
    %530 = vmatmul.mubr.bf16.gmra.mxu0 %v420
    %v531 = vpop.f32.mrf.mxu0
    %v532 = vadd.f32 %v374, %v531
    %v533 = vpop.f32.mrf.mxu0
    %v534 = vpop.f32.mrf.mxu0
    %v535 = vadd.f32 %v374, %v534
    %v536 = vpop.f32.mrf.mxu0
    %537 = vmatprep.mubr.bf16.mxu0 0
    %538 = vmatmul.mubr.bf16.gmra.mxu0 %v423
    %v539 = vpop.f32.mrf.mxu0
    %v540 = vadd.f32 %v374, %v539
    %v541 = vpop.f32.mrf.mxu0
    %v542 = vpop.f32.mrf.mxu0
    %v543 = vadd.f32 %v374, %v542
    %v544 = vpop.f32.mrf.mxu0
    %545 = vmatprep.mubr.bf16.mxu0 0
    %546 = vmatmul.mubr.bf16.gmra.mxu0 %v426
    %v547 = vpop.f32.mrf.mxu0
    %v548 = vadd.f32 %v374, %v547
    %v549 = vpop.f32.mrf.mxu0
    %v550 = vpop.f32.mrf.mxu0
    %v551 = vadd.f32 %v374, %v550
    %v552 = vpop.f32.mrf.mxu0
    %553 = vmatprep.mubr.bf16.mxu0 0
    %554 = vmatmul.mubr.bf16.gmra.mxu0 %v429
    %v555 = vpop.f32.mrf.mxu0
    %v556 = vadd.f32 %v374, %v555
    %v557 = vpop.f32.mrf.mxu0
    %v558 = vpop.f32.mrf.mxu0
    %v559 = vadd.f32 %v374, %v558
    %v560 = vpop.f32.mrf.mxu0
    %561 = vmatprep.mubr.bf16.mxu0 0
    %562 = vmatmul.mubr.bf16.gmra.mxu0 %v432
    %v563 = vpop.f32.mrf.mxu0
    %v564 = vadd.f32 %v374, %v563
    %v565 = vpop.f32.mrf.mxu0
    %v566 = vpop.f32.mrf.mxu0
    %v567 = vadd.f32 %v374, %v566
    %v568 = vpop.f32.mrf.mxu0
    %569 = vmatprep.mubr.bf16.mxu0 0
    %570 = vmatmul.mubr.bf16.gmra.mxu0 %v435
    %v571 = vpop.f32.mrf.mxu0
    %v572 = vadd.f32 %v374, %v571
    %v573 = vpop.f32.mrf.mxu0
    %v574 = vpop.f32.mrf.mxu0
    %v575 = vadd.f32 %v374, %v574
    %v576 = vpop.f32.mrf.mxu0
    %577 = vmatprep.mubr.bf16.mxu0 0
    %578 = vmatmul.mubr.bf16.gmra.mxu0 %v438
    %v579 = vpop.f32.mrf.mxu0
    %v580 = vadd.f32 %v374, %v579
    %v581 = vpop.f32.mrf.mxu0
    %v582 = vpop.f32.mrf.mxu0
    %v583 = vadd.f32 %v374, %v582
    %v584 = vpop.f32.mrf.mxu0
    %585 = vmatprep.mubr.bf16.mxu0 0
    %586 = vmatmul.mubr.bf16.gmra.mxu0 %v441
    %v587 = vpop.f32.mrf.mxu0
    %v588 = vadd.f32 %v374, %v587
    %v589 = vpop.f32.mrf.mxu0
    %v590 = vpop.f32.mrf.mxu0
    %v591 = vadd.f32 %v374, %v590
    %v592 = vpop.f32.mrf.mxu0
    %593 = vmatprep.mubr.bf16.mxu0 0
    %594 = vmatmul.mubr.bf16.gmra.mxu0 %v444
    %v595 = vpop.f32.mrf.mxu0
    %v596 = vadd.f32 %v374, %v595
    %v597 = vpop.f32.mrf.mxu0
    %v598 = vpop.f32.mrf.mxu0
    %v599 = vadd.f32 %v374, %v598
    %v600 = vpop.f32.mrf.mxu0
    %601 = vmatprep.mubr.bf16.mxu0 0
    %602 = vmatmul.mubr.bf16.gmra.mxu0 %v447
    %v603 = vpop.f32.mrf.mxu0
    %v604 = vadd.f32 %v374, %v603
    %v605 = vpop.f32.mrf.mxu0
    %v606 = vpop.f32.mrf.mxu0
    %v607 = vadd.f32 %v374, %v606
    %v608 = vpop.f32.mrf.mxu0
    %609 = vdwg.mxu0
    %v610 = vmax.f32 %v484, 0.0
    %v611 = vmax.f32 %v487, 0.0
    %v612 = vmax.f32 %v492, 0.0
    %v613 = vmax.f32 %v495, 0.0
    %v614 = vmax.f32 %v500, 0.0
    %v615 = vmax.f32 %v503, 0.0
    %v616 = vmax.f32 %v508, 0.0
    %v617 = vmax.f32 %v511, 0.0
    %v618 = vmax.f32 %v516, 0.0
    %v619 = vmax.f32 %v519, 0.0
    %v620 = vmax.f32 %v524, 0.0
    %v621 = vmax.f32 %v527, 0.0
    %v622 = vmax.f32 %v532, 0.0
    %v623 = vmax.f32 %v535, 0.0
    %v624 = vmax.f32 %v540, 0.0
    %v625 = vmax.f32 %v543, 0.0
    %v626 = vmax.f32 %v548, 0.0
    %v627 = vmax.f32 %v551, 0.0
    %v628 = vmax.f32 %v556, 0.0
    %v629 = vmax.f32 %v559, 0.0
    %v630 = vmax.f32 %v564, 0.0
    %v631 = vmax.f32 %v567, 0.0
    %v632 = vmax.f32 %v572, 0.0
    %v633 = vmax.f32 %v575, 0.0
    %v634 = vmax.f32 %v580, 0.0
    %v635 = vmax.f32 %v583, 0.0
    %v636 = vmax.f32 %v588, 0.0
    %v637 = vmax.f32 %v591, 0.0
    %v638 = vmax.f32 %v596, 0.0
    %v639 = vmax.f32 %v599, 0.0
    %v640 = vmax.f32 %v604, 0.0
    %v641 = vmax.f32 %v607, 0.0
    %v642 = vpack.c.bf16 %v611, %v610
    %v643 = vpack.c.bf16 %v613, %v612
    %v644 = vpack.c.bf16 %v615, %v614
    %v645 = vpack.c.bf16 %v617, %v616
    %v646 = vpack.c.bf16 %v619, %v618
    %v647 = vpack.c.bf16 %v621, %v620
    %v648 = vpack.c.bf16 %v623, %v622
    %v649 = vpack.c.bf16 %v625, %v624
    %v650 = vpack.c.bf16 %v627, %v626
    %v651 = vpack.c.bf16 %v629, %v628
    %v652 = vpack.c.bf16 %v631, %v630
    %v653 = vpack.c.bf16 %v633, %v632
    %v654 = vpack.c.bf16 %v635, %v634
    %v655 = vpack.c.bf16 %v637, %v636
    %v656 = vpack.c.bf16 %v639, %v638
    %v657 = vpack.c.bf16 %v641, %v640
    %v658 = vld [vmem:[%s5] sm:$0xf]
    %v659 = vld [vmem:[%s5 + $0x4] sm:$0xf]
    %v660 = vld [vmem:[%s5 + $0x8] sm:$0xf]
    %v661 = vld [vmem:[%s5 + $0xc] sm:$0xf]
    %v662 = vld [vmem:[%s6] sm:$0x1]
    %v664 = vlaneseq
    %v665 = vshrl.u32 %v664, 7
    %v666 = vsub.s32 0, %v665
    %v667 = vrot.slane %v662, %v666
    %v673 = vunpack.c.l.b16 %v658
    %v674 = vunpack.c.l.b16 %v659
    %v675 = vunpack.c.l.b16 %v660
    %v676 = vunpack.c.l.b16 %v661
    %v677 = vpack.c.b16 %v674, %v673
    %v678 = vpack.c.b16 %v676, %v675
    %vm681 = vcmask 261120
    %v683 = vsel %vm681, %v642, 0
    %v686 = vsel %vm681, %v643, 0
    %v689 = vsel %vm681, %v644, 0
    %v692 = vsel %vm681, %v645, 0
    %v695 = vsel %vm681, %v646, 0
    %v698 = vsel %vm681, %v647, 0
    %v701 = vsel %vm681, %v648, 0
    %v704 = vsel %vm681, %v649, 0
    %v707 = vsel %vm681, %v650, 0
    %v710 = vsel %vm681, %v651, 0
    %v713 = vsel %vm681, %v652, 0
    %v716 = vsel %vm681, %v653, 0
    %v719 = vsel %vm681, %v654, 0
    %v722 = vsel %vm681, %v655, 0
    %v725 = vsel %vm681, %v656, 0
    %v728 = vsel %vm681, %v657, 0
    %730 = vmatprep.subr.bf16.mxu0 0
    %731 = vmatpush1.bf16.msra.mxu0 0
    %732 = vmatprep.subr.bf16.mxu0 0
    %733 = vmatpush1.bf16.msra.mxu0 0
    %734 = vmatprep.subr.bf16.mxu0 0
    %735 = vmatpush1.bf16.msra.mxu0 0
    %736 = vmatprep.subr.bf16.mxu0 0
    %737 = vmatpush1.bf16.msra.mxu0 0
    %738 = vmatprep.subr.bf16.mxu0 0
    %739 = vmatpush1.bf16.msra.mxu0 0
    %740 = vmatprep.subr.bf16.mxu0 0
    %741 = vmatpush1.bf16.msra.mxu0 0
    %742 = vmatprep.subr.bf16.mxu0 0
    %743 = vmatpush1.bf16.msra.mxu0 %v678
    %744 = vmatprep.subr.bf16.mxu0 0
    %745 = vmatpush1.bf16.msra.mxu0 %v677
    %746 = vmatprep.subr.bf16.mxu0 0
    %747 = vmatpush2.bf16.msra.mxu0 0
    %748 = vmatprep.subr.bf16.mxu0 0
    %749 = vmatpush2.bf16.msra.mxu0 0
    %750 = vmatprep.subr.bf16.mxu0 0
    %751 = vmatpush2.bf16.msra.mxu0 0
    %752 = vmatprep.subr.bf16.mxu0 0
    %753 = vmatpush2.bf16.msra.mxu0 0
    %754 = vmatprep.subr.bf16.mxu0 0
    %755 = vmatpush2.bf16.msra.mxu0 0
    %756 = vmatprep.subr.bf16.mxu0 0
    %757 = vmatpush2.bf16.msra.mxu0 0
    %758 = vmatprep.subr.bf16.mxu0 0
    %759 = vmatpush2.bf16.msra.mxu0 0
    %760 = vmatprep.subr.bf16.mxu0 0
    %761 = vmatpush2.bf16.msra.mxu0 0
    %762 = vmatprep.mubr.bf16.mxu0 0
    %763 = vmatmul.mubr.bf16.gmra.mxu0 %v683
    %v764 = vpop.f32.mrf.mxu0
    %v765 = vadd.f32 %v667, %v764
    %v766 = vpop.f32.mrf.mxu0
    %v767 = vpop.f32.mrf.mxu0
    %v768 = vadd.f32 %v667, %v767
    %v769 = vpop.f32.mrf.mxu0
    %770 = vmatprep.mubr.bf16.mxu0 0
    %771 = vmatmul.mubr.bf16.gmra.mxu0 %v686
    %v772 = vpop.f32.mrf.mxu0
    %v773 = vadd.f32 %v667, %v772
    %v774 = vpop.f32.mrf.mxu0
    %v775 = vpop.f32.mrf.mxu0
    %v776 = vadd.f32 %v667, %v775
    %v777 = vpop.f32.mrf.mxu0
    %778 = vmatprep.mubr.bf16.mxu0 0
    %779 = vmatmul.mubr.bf16.gmra.mxu0 %v689
    %v780 = vpop.f32.mrf.mxu0
    %v781 = vadd.f32 %v667, %v780
    %v782 = vpop.f32.mrf.mxu0
    %v783 = vpop.f32.mrf.mxu0
    %v784 = vadd.f32 %v667, %v783
    %v785 = vpop.f32.mrf.mxu0
    %786 = vmatprep.mubr.bf16.mxu0 0
    %787 = vmatmul.mubr.bf16.gmra.mxu0 %v692
    %v788 = vpop.f32.mrf.mxu0
    %v789 = vadd.f32 %v667, %v788
    %v790 = vpop.f32.mrf.mxu0
    %v791 = vpop.f32.mrf.mxu0
    %v792 = vadd.f32 %v667, %v791
    %v793 = vpop.f32.mrf.mxu0
    %794 = vmatprep.mubr.bf16.mxu0 0
    %795 = vmatmul.mubr.bf16.gmra.mxu0 %v695
    %v796 = vpop.f32.mrf.mxu0
    %v797 = vadd.f32 %v667, %v796
    %v798 = vpop.f32.mrf.mxu0
    %v799 = vpop.f32.mrf.mxu0
    %v800 = vadd.f32 %v667, %v799
    %v801 = vpop.f32.mrf.mxu0
    %802 = vmatprep.mubr.bf16.mxu0 0
    %803 = vmatmul.mubr.bf16.gmra.mxu0 %v698
    %v804 = vpop.f32.mrf.mxu0
    %v805 = vadd.f32 %v667, %v804
    %v806 = vpop.f32.mrf.mxu0
    %v807 = vpop.f32.mrf.mxu0
    %v808 = vadd.f32 %v667, %v807
    %v809 = vpop.f32.mrf.mxu0
    %810 = vmatprep.mubr.bf16.mxu0 0
    %811 = vmatmul.mubr.bf16.gmra.mxu0 %v701
    %v812 = vpop.f32.mrf.mxu0
    %v813 = vadd.f32 %v667, %v812
    %v814 = vpop.f32.mrf.mxu0
    %v815 = vpop.f32.mrf.mxu0
    %v816 = vadd.f32 %v667, %v815
    %v817 = vpop.f32.mrf.mxu0
    %818 = vmatprep.mubr.bf16.mxu0 0
    %819 = vmatmul.mubr.bf16.gmra.mxu0 %v704
    %v820 = vpop.f32.mrf.mxu0
    %v821 = vadd.f32 %v667, %v820
    %v822 = vpop.f32.mrf.mxu0
    %v823 = vpop.f32.mrf.mxu0
    %v824 = vadd.f32 %v667, %v823
    %v825 = vpop.f32.mrf.mxu0
    %826 = vmatprep.mubr.bf16.mxu0 0
    %827 = vmatmul.mubr.bf16.gmra.mxu0 %v707
    %v828 = vpop.f32.mrf.mxu0
    %v829 = vadd.f32 %v667, %v828
    %v830 = vpop.f32.mrf.mxu0
    %v831 = vpop.f32.mrf.mxu0
    %v832 = vadd.f32 %v667, %v831
    %v833 = vpop.f32.mrf.mxu0
    %834 = vmatprep.mubr.bf16.mxu0 0
    %835 = vmatmul.mubr.bf16.gmra.mxu0 %v710
    %v836 = vpop.f32.mrf.mxu0
    %v837 = vadd.f32 %v667, %v836
    %v838 = vpop.f32.mrf.mxu0
    %v839 = vpop.f32.mrf.mxu0
    %v840 = vadd.f32 %v667, %v839
    %v841 = vpop.f32.mrf.mxu0
    %842 = vmatprep.mubr.bf16.mxu0 0
    %843 = vmatmul.mubr.bf16.gmra.mxu0 %v713
    %v844 = vpop.f32.mrf.mxu0
    %v845 = vadd.f32 %v667, %v844
    %v846 = vpop.f32.mrf.mxu0
    %v847 = vpop.f32.mrf.mxu0
    %v848 = vadd.f32 %v667, %v847
    %v849 = vpop.f32.mrf.mxu0
    %850 = vmatprep.mubr.bf16.mxu0 0
    %851 = vmatmul.mubr.bf16.gmra.mxu0 %v716
    %v852 = vpop.f32.mrf.mxu0
    %v853 = vadd.f32 %v667, %v852
    %v854 = vpop.f32.mrf.mxu0
    %v855 = vpop.f32.mrf.mxu0
    %v856 = vadd.f32 %v667, %v855
    %v857 = vpop.f32.mrf.mxu0
    %858 = vmatprep.mubr.bf16.mxu0 0
    %859 = vmatmul.mubr.bf16.gmra.mxu0 %v719
    %v860 = vpop.f32.mrf.mxu0
    %v861 = vadd.f32 %v667, %v860
    %v862 = vpop.f32.mrf.mxu0
    %v863 = vpop.f32.mrf.mxu0
    %v864 = vadd.f32 %v667, %v863
    %v865 = vpop.f32.mrf.mxu0
    %866 = vmatprep.mubr.bf16.mxu0 0
    %867 = vmatmul.mubr.bf16.gmra.mxu0 %v722
    %v868 = vpop.f32.mrf.mxu0
    %v869 = vadd.f32 %v667, %v868
    %v870 = vpop.f32.mrf.mxu0
    %v871 = vpop.f32.mrf.mxu0
    %v872 = vadd.f32 %v667, %v871
    %v873 = vpop.f32.mrf.mxu0
    %874 = vmatprep.mubr.bf16.mxu0 0
    %875 = vmatmul.mubr.bf16.gmra.mxu0 %v725
    %v876 = vpop.f32.mrf.mxu0
    %v877 = vadd.f32 %v667, %v876
    %v878 = vpop.f32.mrf.mxu0
    %v879 = vpop.f32.mrf.mxu0
    %v880 = vadd.f32 %v667, %v879
    %v881 = vpop.f32.mrf.mxu0
    %882 = vmatprep.mubr.bf16.mxu0 0
    %883 = vmatmul.mubr.bf16.gmra.mxu0 %v728
    %v884 = vpop.f32.mrf.mxu0
    %v885 = vadd.f32 %v667, %v884
    %v886 = vpop.f32.mrf.mxu0
    %v887 = vpop.f32.mrf.mxu0
    %v888 = vadd.f32 %v667, %v887
    %v889 = vpop.f32.mrf.mxu0
    %890 = vdwg.mxu0
    %v891 = vmax.f32 %v765, 0.0
    %v892 = vmax.f32 %v768, 0.0
    %v893 = vmax.f32 %v773, 0.0
    %v894 = vmax.f32 %v776, 0.0
    %v895 = vmax.f32 %v781, 0.0
    %v896 = vmax.f32 %v784, 0.0
    %v897 = vmax.f32 %v789, 0.0
    %v898 = vmax.f32 %v792, 0.0
    %v899 = vmax.f32 %v797, 0.0
    %v900 = vmax.f32 %v800, 0.0
    %v901 = vmax.f32 %v805, 0.0
    %v902 = vmax.f32 %v808, 0.0
    %v903 = vmax.f32 %v813, 0.0
    %v904 = vmax.f32 %v816, 0.0
    %v905 = vmax.f32 %v821, 0.0
    %v906 = vmax.f32 %v824, 0.0
    %v907 = vmax.f32 %v829, 0.0
    %v908 = vmax.f32 %v832, 0.0
    %v909 = vmax.f32 %v837, 0.0
    %v910 = vmax.f32 %v840, 0.0
    %v911 = vmax.f32 %v845, 0.0
    %v912 = vmax.f32 %v848, 0.0
    %v913 = vmax.f32 %v853, 0.0
    %v914 = vmax.f32 %v856, 0.0
    %v915 = vmax.f32 %v861, 0.0
    %v916 = vmax.f32 %v864, 0.0
    %v917 = vmax.f32 %v869, 0.0
    %v918 = vmax.f32 %v872, 0.0
    %v919 = vmax.f32 %v877, 0.0
    %v920 = vmax.f32 %v880, 0.0
    %v921 = vmax.f32 %v885, 0.0
    %v922 = vmax.f32 %v888, 0.0
    %v923 = vpack.c.bf16 %v892, %v891
    %v924 = vpack.c.bf16 %v894, %v893
    %v925 = vpack.c.bf16 %v896, %v895
    %v926 = vpack.c.bf16 %v898, %v897
    %v927 = vpack.c.bf16 %v900, %v899
    %v928 = vpack.c.bf16 %v902, %v901
    %v929 = vpack.c.bf16 %v904, %v903
    %v930 = vpack.c.bf16 %v906, %v905
    %v931 = vpack.c.bf16 %v908, %v907
    %v932 = vpack.c.bf16 %v910, %v909
    %v933 = vpack.c.bf16 %v912, %v911
    %v934 = vpack.c.bf16 %v914, %v913
    %v935 = vpack.c.bf16 %v916, %v915
    %v936 = vpack.c.bf16 %v918, %v917
    %v937 = vpack.c.bf16 %v920, %v919
    %v938 = vpack.c.bf16 %v922, %v921
    %v939 = vld [vmem:[%s7] sm:$0xf]
    %v940 = vld [vmem:[%s7 + $0x4] sm:$0xf]
    %v941 = vld [vmem:[%s8] sm:$0x1]
    %v943 = vlaneseq
    %v944 = vshrl.u32 %v943, 7
    %v945 = vsub.s32 0, %v944
    %v946 = vrot.slane %v941, %v945
    %v950 = vunpack.c.l.b16 %v939
    %v951 = vunpack.c.l.b16 %v940
    %v952 = vpack.c.b16 %v951, %v950
    %vm954 = vcmask 130048
    %v956 = vsel %vm954, %v923, 0
    %v959 = vsel %vm954, %v924, 0
    %v962 = vsel %vm954, %v925, 0
    %v965 = vsel %vm954, %v926, 0
    %v968 = vsel %vm954, %v927, 0
    %v971 = vsel %vm954, %v928, 0
    %v974 = vsel %vm954, %v929, 0
    %v977 = vsel %vm954, %v930, 0
    %v980 = vsel %vm954, %v931, 0
    %v983 = vsel %vm954, %v932, 0
    %v986 = vsel %vm954, %v933, 0
    %v989 = vsel %vm954, %v934, 0
    %v992 = vsel %vm954, %v935, 0
    %v995 = vsel %vm954, %v936, 0
    %v998 = vsel %vm954, %v937, 0
    %v1001 = vsel %vm954, %v938, 0
    %1003 = vmatprep.subr.bf16.mxu0 0
    %1004 = vmatpush1.bf16.msra.mxu0 0
    %1005 = vmatprep.subr.bf16.mxu0 0
    %1006 = vmatpush1.bf16.msra.mxu0 0
    %1007 = vmatprep.subr.bf16.mxu0 0
    %1008 = vmatpush1.bf16.msra.mxu0 0
    %1009 = vmatprep.subr.bf16.mxu0 0
    %1010 = vmatpush1.bf16.msra.mxu0 0
    %1011 = vmatprep.subr.bf16.mxu0 0
    %1012 = vmatpush1.bf16.msra.mxu0 0
    %1013 = vmatprep.subr.bf16.mxu0 0
    %1014 = vmatpush1.bf16.msra.mxu0 0
    %1015 = vmatprep.subr.bf16.mxu0 0
    %1016 = vmatpush1.bf16.msra.mxu0 0
    %1017 = vmatprep.subr.bf16.mxu0 0
    %1018 = vmatpush1.bf16.msra.mxu0 %v952
    %1019 = vmatprep.subr.bf16.mxu0 0
    %1020 = vmatpush2.bf16.msra.mxu0 0
    %1021 = vmatprep.subr.bf16.mxu0 0
    %1022 = vmatpush2.bf16.msra.mxu0 0
    %1023 = vmatprep.subr.bf16.mxu0 0
    %1024 = vmatpush2.bf16.msra.mxu0 0
    %1025 = vmatprep.subr.bf16.mxu0 0
    %1026 = vmatpush2.bf16.msra.mxu0 0
    %1027 = vmatprep.subr.bf16.mxu0 0
    %1028 = vmatpush2.bf16.msra.mxu0 0
    %1029 = vmatprep.subr.bf16.mxu0 0
    %1030 = vmatpush2.bf16.msra.mxu0 0
    %1031 = vmatprep.subr.bf16.mxu0 0
    %1032 = vmatpush2.bf16.msra.mxu0 0
    %1033 = vmatprep.subr.bf16.mxu0 0
    %1034 = vmatpush2.bf16.msra.mxu0 0
    %1035 = vmatprep.mubr.bf16.mxu0 0
    %1036 = vmatmul.mubr.bf16.gmra.mxu0 %v956
    %v1037 = vpop.f32.mrf.mxu0
    %v1038 = vadd.f32 %v946, %v1037
    %v1039 = vpop.f32.mrf.mxu0
    %v1040 = vpop.f32.mrf.mxu0
    %v1041 = vadd.f32 %v946, %v1040
    %v1042 = vpop.f32.mrf.mxu0
    %1043 = vmatprep.mubr.bf16.mxu0 0
    %1044 = vmatmul.mubr.bf16.gmra.mxu0 %v959
    %v1045 = vpop.f32.mrf.mxu0
    %v1046 = vadd.f32 %v946, %v1045
    %v1047 = vpop.f32.mrf.mxu0
    %v1048 = vpop.f32.mrf.mxu0
    %v1049 = vadd.f32 %v946, %v1048
    %v1050 = vpop.f32.mrf.mxu0
    %1051 = vmatprep.mubr.bf16.mxu0 0
    %1052 = vmatmul.mubr.bf16.gmra.mxu0 %v962
    %v1053 = vpop.f32.mrf.mxu0
    %v1054 = vadd.f32 %v946, %v1053
    %v1055 = vpop.f32.mrf.mxu0
    %v1056 = vpop.f32.mrf.mxu0
    %v1057 = vadd.f32 %v946, %v1056
    %v1058 = vpop.f32.mrf.mxu0
    %1059 = vmatprep.mubr.bf16.mxu0 0
    %1060 = vmatmul.mubr.bf16.gmra.mxu0 %v965
    %v1061 = vpop.f32.mrf.mxu0
    %v1062 = vadd.f32 %v946, %v1061
    %v1063 = vpop.f32.mrf.mxu0
    %v1064 = vpop.f32.mrf.mxu0
    %v1065 = vadd.f32 %v946, %v1064
    %v1066 = vpop.f32.mrf.mxu0
    %1067 = vmatprep.mubr.bf16.mxu0 0
    %1068 = vmatmul.mubr.bf16.gmra.mxu0 %v968
    %v1069 = vpop.f32.mrf.mxu0
    %v1070 = vadd.f32 %v946, %v1069
    %v1071 = vpop.f32.mrf.mxu0
    %v1072 = vpop.f32.mrf.mxu0
    %v1073 = vadd.f32 %v946, %v1072
    %v1074 = vpop.f32.mrf.mxu0
    %1075 = vmatprep.mubr.bf16.mxu0 0
    %1076 = vmatmul.mubr.bf16.gmra.mxu0 %v971
    %v1077 = vpop.f32.mrf.mxu0
    %v1078 = vadd.f32 %v946, %v1077
    %v1079 = vpop.f32.mrf.mxu0
    %v1080 = vpop.f32.mrf.mxu0
    %v1081 = vadd.f32 %v946, %v1080
    %v1082 = vpop.f32.mrf.mxu0
    %1083 = vmatprep.mubr.bf16.mxu0 0
    %1084 = vmatmul.mubr.bf16.gmra.mxu0 %v974
    %v1085 = vpop.f32.mrf.mxu0
    %v1086 = vadd.f32 %v946, %v1085
    %v1087 = vpop.f32.mrf.mxu0
    %v1088 = vpop.f32.mrf.mxu0
    %v1089 = vadd.f32 %v946, %v1088
    %v1090 = vpop.f32.mrf.mxu0
    %1091 = vmatprep.mubr.bf16.mxu0 0
    %1092 = vmatmul.mubr.bf16.gmra.mxu0 %v977
    %v1093 = vpop.f32.mrf.mxu0
    %v1094 = vadd.f32 %v946, %v1093
    %v1095 = vpop.f32.mrf.mxu0
    %v1096 = vpop.f32.mrf.mxu0
    %v1097 = vadd.f32 %v946, %v1096
    %v1098 = vpop.f32.mrf.mxu0
    %1099 = vmatprep.mubr.bf16.mxu0 0
    %1100 = vmatmul.mubr.bf16.gmra.mxu0 %v980
    %v1101 = vpop.f32.mrf.mxu0
    %v1102 = vadd.f32 %v946, %v1101
    %v1103 = vpop.f32.mrf.mxu0
    %v1104 = vpop.f32.mrf.mxu0
    %v1105 = vadd.f32 %v946, %v1104
    %v1106 = vpop.f32.mrf.mxu0
    %1107 = vmatprep.mubr.bf16.mxu0 0
    %1108 = vmatmul.mubr.bf16.gmra.mxu0 %v983
    %v1109 = vpop.f32.mrf.mxu0
    %v1110 = vadd.f32 %v946, %v1109
    %v1111 = vpop.f32.mrf.mxu0
    %v1112 = vpop.f32.mrf.mxu0
    %v1113 = vadd.f32 %v946, %v1112
    %v1114 = vpop.f32.mrf.mxu0
    %1115 = vmatprep.mubr.bf16.mxu0 0
    %1116 = vmatmul.mubr.bf16.gmra.mxu0 %v986
    %v1117 = vpop.f32.mrf.mxu0
    %v1118 = vadd.f32 %v946, %v1117
    %v1119 = vpop.f32.mrf.mxu0
    %v1120 = vpop.f32.mrf.mxu0
    %v1121 = vadd.f32 %v946, %v1120
    %v1122 = vpop.f32.mrf.mxu0
    %1123 = vmatprep.mubr.bf16.mxu0 0
    %1124 = vmatmul.mubr.bf16.gmra.mxu0 %v989
    %v1125 = vpop.f32.mrf.mxu0
    %v1126 = vadd.f32 %v946, %v1125
    %v1127 = vpop.f32.mrf.mxu0
    %v1128 = vpop.f32.mrf.mxu0
    %v1129 = vadd.f32 %v946, %v1128
    %v1130 = vpop.f32.mrf.mxu0
    %1131 = vmatprep.mubr.bf16.mxu0 0
    %1132 = vmatmul.mubr.bf16.gmra.mxu0 %v992
    %v1133 = vpop.f32.mrf.mxu0
    %v1134 = vadd.f32 %v946, %v1133
    %v1135 = vpop.f32.mrf.mxu0
    %v1136 = vpop.f32.mrf.mxu0
    %v1137 = vadd.f32 %v946, %v1136
    %v1138 = vpop.f32.mrf.mxu0
    %1139 = vmatprep.mubr.bf16.mxu0 0
    %1140 = vmatmul.mubr.bf16.gmra.mxu0 %v995
    %v1141 = vpop.f32.mrf.mxu0
    %v1142 = vadd.f32 %v946, %v1141
    %v1143 = vpop.f32.mrf.mxu0
    %v1144 = vpop.f32.mrf.mxu0
    %v1145 = vadd.f32 %v946, %v1144
    %v1146 = vpop.f32.mrf.mxu0
    %1147 = vmatprep.mubr.bf16.mxu0 0
    %1148 = vmatmul.mubr.bf16.gmra.mxu0 %v998
    %v1149 = vpop.f32.mrf.mxu0
    %v1150 = vadd.f32 %v946, %v1149
    %v1151 = vpop.f32.mrf.mxu0
    %v1152 = vpop.f32.mrf.mxu0
    %v1153 = vadd.f32 %v946, %v1152
    %v1154 = vpop.f32.mrf.mxu0
    %1155 = vmatprep.mubr.bf16.mxu0 0
    %1156 = vmatmul.mubr.bf16.gmra.mxu0 %v1001
    %v1157 = vpop.f32.mrf.mxu0
    %v1158 = vadd.f32 %v946, %v1157
    %v1159 = vpop.f32.mrf.mxu0
    %v1160 = vpop.f32.mrf.mxu0
    %v1161 = vadd.f32 %v946, %v1160
    %v1162 = vpop.f32.mrf.mxu0
    %1163 = vdwg.mxu0
    %v1164 = vpack.c.bf16 %v1041, %v1038
    %v1165 = vpack.c.bf16 %v1049, %v1046
    %v1166 = vpack.c.bf16 %v1057, %v1054
    %v1167 = vpack.c.bf16 %v1065, %v1062
    %v1168 = vpack.c.bf16 %v1073, %v1070
    %v1169 = vpack.c.bf16 %v1081, %v1078
    %v1170 = vpack.c.bf16 %v1089, %v1086
    %v1171 = vpack.c.bf16 %v1097, %v1094
    %v1172 = vpack.c.bf16 %v1105, %v1102
    %v1173 = vpack.c.bf16 %v1113, %v1110
    %v1174 = vpack.c.bf16 %v1121, %v1118
    %v1175 = vpack.c.bf16 %v1129, %v1126
    %v1176 = vpack.c.bf16 %v1137, %v1134
    %v1177 = vpack.c.bf16 %v1145, %v1142
    %v1178 = vpack.c.bf16 %v1153, %v1150
    %v1179 = vpack.c.bf16 %v1161, %v1158
    %v1196 = vunpack.c.l.b16 %v1164
    %v1197 = vunpack.c.h.b16 %v1164
    %v1198 = vunpack.c.l.b16 %v1165
    %v1199 = vunpack.c.h.b16 %v1165
    %v1200 = vunpack.c.l.b16 %v1166
    %v1201 = vunpack.c.h.b16 %v1166
    %v1202 = vunpack.c.l.b16 %v1167
    %v1203 = vunpack.c.h.b16 %v1167
    %v1204 = vunpack.c.l.b16 %v1168
    %v1205 = vunpack.c.h.b16 %v1168
    %v1206 = vunpack.c.l.b16 %v1169
    %v1207 = vunpack.c.h.b16 %v1169
    %v1208 = vunpack.c.l.b16 %v1170
    %v1209 = vunpack.c.h.b16 %v1170
    %v1210 = vunpack.c.l.b16 %v1171
    %v1211 = vunpack.c.h.b16 %v1171
    %v1212 = vunpack.c.l.b16 %v1172
    %v1213 = vunpack.c.h.b16 %v1172
    %v1214 = vunpack.c.l.b16 %v1173
    %v1215 = vunpack.c.h.b16 %v1173
    %v1216 = vunpack.c.l.b16 %v1174
    %v1217 = vunpack.c.h.b16 %v1174
    %v1218 = vunpack.c.l.b16 %v1175
    %v1219 = vunpack.c.h.b16 %v1175
    %v1220 = vunpack.c.l.b16 %v1176
    %v1221 = vunpack.c.h.b16 %v1176
    %v1222 = vunpack.c.l.b16 %v1177
    %v1223 = vunpack.c.h.b16 %v1177
    %v1224 = vunpack.c.l.b16 %v1178
    %v1225 = vunpack.c.h.b16 %v1178
    %v1226 = vunpack.c.l.b16 %v1179
    %v1227 = vunpack.c.h.b16 %v1179
    %v1228 = vpack.c.b16 %v1196, %v1196
    %v1229 = vpack.c.b16 %v1197, %v1197
    %v1230 = vpack.c.b16 %v1198, %v1198
    %v1231 = vpack.c.b16 %v1199, %v1199
    %v1232 = vpack.c.b16 %v1200, %v1200
    %v1233 = vpack.c.b16 %v1201, %v1201
    %v1234 = vpack.c.b16 %v1202, %v1202
    %v1235 = vpack.c.b16 %v1203, %v1203
    %v1236 = vpack.c.b16 %v1204, %v1204
    %v1237 = vpack.c.b16 %v1205, %v1205
    %v1238 = vpack.c.b16 %v1206, %v1206
    %v1239 = vpack.c.b16 %v1207, %v1207
    %v1240 = vpack.c.b16 %v1208, %v1208
    %v1241 = vpack.c.b16 %v1209, %v1209
    %v1242 = vpack.c.b16 %v1210, %v1210
    %v1243 = vpack.c.b16 %v1211, %v1211
    %v1244 = vpack.c.b16 %v1212, %v1212
    %v1245 = vpack.c.b16 %v1213, %v1213
    %v1246 = vpack.c.b16 %v1214, %v1214
    %v1247 = vpack.c.b16 %v1215, %v1215
    %v1248 = vpack.c.b16 %v1216, %v1216
    %v1249 = vpack.c.b16 %v1217, %v1217
    %v1250 = vpack.c.b16 %v1218, %v1218
    %v1251 = vpack.c.b16 %v1219, %v1219
    %v1252 = vpack.c.b16 %v1220, %v1220
    %v1253 = vpack.c.b16 %v1221, %v1221
    %v1254 = vpack.c.b16 %v1222, %v1222
    %v1255 = vpack.c.b16 %v1223, %v1223
    %v1256 = vpack.c.b16 %v1224, %v1224
    %v1257 = vpack.c.b16 %v1225, %v1225
    %v1258 = vpack.c.b16 %v1226, %v1226
    %v1259 = vpack.c.b16 %v1227, %v1227
    %1292 = vst [vmem:[#allocation2] sm:$0xf] %v1228
    %1293 = vst [vmem:[#allocation2 + $0x4] sm:$0xf] %v1229
    %1294 = vst [vmem:[#allocation2 + $0x8] sm:$0xf] %v1230
    %1295 = vst [vmem:[#allocation2 + $0xc] sm:$0xf] %v1231
    %1296 = vst [vmem:[#allocation2 + $0x10] sm:$0xf] %v1232
    %1297 = vst [vmem:[#allocation2 + $0x14] sm:$0xf] %v1233
    %1298 = vst [vmem:[#allocation2 + $0x18] sm:$0xf] %v1234
    %1299 = vst [vmem:[#allocation2 + $0x1c] sm:$0xf] %v1235
    %1300 = vst [vmem:[#allocation2 + $0x20] sm:$0xf] %v1236
    %1301 = vst [vmem:[#allocation2 + $0x24] sm:$0xf] %v1237
    %1302 = vst [vmem:[#allocation2 + $0x28] sm:$0xf] %v1238
    %1303 = vst [vmem:[#allocation2 + $0x2c] sm:$0xf] %v1239
    %1304 = vst [vmem:[#allocation2 + $0x30] sm:$0xf] %v1240
    %1305 = vst [vmem:[#allocation2 + $0x34] sm:$0xf] %v1241
    %1306 = vst [vmem:[#allocation2 + $0x38] sm:$0xf] %v1242
    %1307 = vst [vmem:[#allocation2 + $0x3c] sm:$0xf] %v1243
    %1308 = vst [vmem:[#allocation2 + $0x40] sm:$0xf] %v1244
    %1309 = vst [vmem:[#allocation2 + $0x44] sm:$0xf] %v1245
    %1310 = vst [vmem:[#allocation2 + $0x48] sm:$0xf] %v1246
    %1311 = vst [vmem:[#allocation2 + $0x4c] sm:$0xf] %v1247
    %1312 = vst [vmem:[#allocation2 + $0x50] sm:$0xf] %v1248
    %1313 = vst [vmem:[#allocation2 + $0x54] sm:$0xf] %v1249
    %1314 = vst [vmem:[#allocation2 + $0x58] sm:$0xf] %v1250
    %1315 = vst [vmem:[#allocation2 + $0x5c] sm:$0xf] %v1251
    %1316 = vst [vmem:[#allocation2 + $0x60] sm:$0xf] %v1252
    %1317 = vst [vmem:[#allocation2 + $0x64] sm:$0xf] %v1253
    %1318 = vst [vmem:[#allocation2 + $0x68] sm:$0xf] %v1254
    %1319 = vst [vmem:[#allocation2 + $0x6c] sm:$0xf] %v1255
    %1320 = vst [vmem:[#allocation2 + $0x70] sm:$0xf] %v1256
    %1321 = vst [vmem:[#allocation2 + $0x74] sm:$0xf] %v1257
    %1322 = vst [vmem:[#allocation2 + $0x78] sm:$0xf] %v1258
    %1323 = vst [vmem:[#allocation2 + $0x7c] sm:$0xf] %v1259
    // Predicated region
    $region38: #{tpu_custom_call.1} parent=1 // pred_check
      _
    $region39: #{tpu_custom_call.1} parent=1 // pred_check_branch
      %1325 = sbr.rel (0) target = $region41
    $region40: #{tpu_custom_call.1} parent=1 // pred_region
      %s1327 = ssub.s32 2048, 2048
      %1328 = vsyncadd [#allocation3], %s1327
      %s1329 = sshll.u32 [#allocation2], 4
      %s1330 = int_to_ptr.vmem [resolvable:$true] %s1329
      %1335 = dma.vmem_to_hbm [thread:$0]  %s1330, 2048, %s9, [#allocation3], 64, 64, 4
    $region41: #{tpu_custom_call.1} parent=1 // pred_fallthru
      _
    // Predicated region
    $region42: #{tpu_custom_call.1} parent=1 // pred_check
      _
    $region43: #{tpu_custom_call.1} parent=1 // pred_check_branch
      %1337 = sbr.rel (0) target = $region45
    $region44: #{tpu_custom_call.1} parent=1 // pred_region
      %1338 = dma.done [#allocation3], 2048
    $region45: #{tpu_custom_call.1} parent=1 // pred_fallthru
      _
    %1339 = vsyncpa [#allocation3], 1

</llo_original>
